<compile_context>
chip_gen: v7x
topology: tpu7x:2x2x1
jax: 0.10.0
libtpu: 0.0.40
codegen_flags: <defaults>
</compile_context>

<pallas_src>
import jax
import jax.numpy as jnp
from jax.experimental import pallas as pl
from jax.experimental.pallas import tpu as pltpu

_LANES = 128
_DEFAULT_BLOCK_BYTES = 8 * 1024 * 1024  # ~8 MiB per block (perf review: 6-8 MiB)


def _swish_kernel(x_ref, o_ref):
    x = x_ref[...]
    # sigmoid(x) = 0.5 * tanh(0.5 * x) + 0.5  -> single EUP transcendental,
    # cheap VPU mul/add; avoids the exp + Newton-divide path.
    sig = jnp.tanh(x * 0.5) * 0.5 + 0.5
    o_ref[...] = x * sig


def _sublane_multiple(dtype) -> int:
    # Min tile is (8,128) for 32-bit, (16,128) for bf16, (32,128) for int8/fp8:
    # sub-32-bit dtypes pack along sublanes.
    itemsize = int(jnp.dtype(dtype).itemsize)
    return max(8, 32 // max(itemsize, 1))


def _chip_info():
    """(physical VMEM bytes, TensorCores per chip) with conservative fallbacks."""
    vmem_bytes = 64 << 20  # v7x has the smallest physical VMEM -> safe default
    num_tc = 1
    try:
        info = pltpu.get_tpu_info()
        vmem_bytes = int(getattr(info, "vmem_capacity_bytes", vmem_bytes))
    except Exception:
        pass
    try:
        kind = jax.devices()[0].device_kind.lower()
        if "v7" in kind or "tpu7" in kind:
            num_tc = 2
    except Exception:
        pass
    return vmem_bytes, num_tc


def _swish_2d(x2d: jax.Array, target_block_bytes: int) -> jax.Array:
    """Pallas Swish over a lane-dense (rows, 128) view (rows*128 elements)."""
    rows, _ = x2d.shape
    dtype = x2d.dtype
    itemsize = int(jnp.dtype(dtype).itemsize)
    sublane = _sublane_multiple(dtype)
    vmem_cap, num_tc = _chip_info()

    # Generation-aware clamp: 4 double-buffered in/out tiles + ~16 MiB headroom
    # must fit physical VMEM (64 MiB v7x, 128 MiB v5e/v6e).
    max_block_bytes = max(_LANES * itemsize * sublane,
                          min(int(target_block_bytes), (vmem_cap - (16 << 20)) // 4))
    max_tile_rows = max(sublane,
                        (max_block_bytes // (_LANES * itemsize)) // sublane * sublane)

    # --- Tile selection -------------------------------------------------------
    if rows < 2 * sublane or (num_tc == 1 and rows <= max_tile_rows):
        # One block equal to the full extent (legal even if not a sublane
        # multiple).  On 1-TC chips a single-block array stays a single step.
        tile_rows = rows
    elif rows <= max_tile_rows:
        # Whole array fits one block but 2 TCs are available: split in two so
        # both v7x TensorCores get a block.
        tile_rows = pl.cdiv(pl.cdiv(rows, 2), sublane) * sublane
    else:
        tile_rows = max_tile_rows

    num_blocks = pl.cdiv(rows, tile_rows)

    # v7x load balance: avoid small odd block counts across the 2 TCs.
    if num_tc >= 2 and 1 < num_blocks < 8 and (num_blocks % 2) == 1:
        tile_rows = max(sublane,
                        pl.cdiv(pl.cdiv(rows, num_blocks + 1), sublane) * sublane)
        num_blocks = pl.cdiv(rows, tile_rows)

    # VMEM: double-buffered input + output = ~4 x tile_bytes.  Raise the scoped
    # limit only when the 16 MiB v5e default is too small (already clamped to
    # physical capacity above).
    tile_bytes = tile_rows * _LANES * itemsize
    vmem_needed = 4 * tile_bytes + (2 << 20)
    vmem_limit = vmem_needed if vmem_needed > (16 << 20) else None

    n = rows * _LANES
    cost = pl.CostEstimate(flops=4 * n,
                           transcendentals=n,
                           bytes_accessed=2 * n * itemsize)

    return pl.pallas_call(
        _swish_kernel,
        out_shape=jax.ShapeDtypeStruct((rows, _LANES), dtype),
        grid_spec=pltpu.PrefetchScalarGridSpec(
            num_scalar_prefetch=0,
            grid=(num_blocks,),
            in_specs=[pl.BlockSpec((tile_rows, _LANES), lambda i: (i, 0))],
            out_specs=pl.BlockSpec((tile_rows, _LANES), lambda i: (i, 0)),
        ),
        compiler_params=pltpu.CompilerParams(
            dimension_semantics=("parallel",),
            vmem_limit_bytes=vmem_limit,
        ),
        cost_estimate=cost,
    )(x2d)


def swish_pallas(x: jax.Array, *, target_block_bytes: int = _DEFAULT_BLOCK_BYTES) -> jax.Array:
    """Elementwise Swish.  Matches PyTorch `x * torch.sigmoid(x)`.  The inplace
    branch of the original module is semantically identical (JAX arrays are
    immutable, so an out-of-place result is the only meaningful translation)."""
    orig_shape = x.shape
    n = x.size
    if n == 0:
        return x

    flat = x.reshape(-1)
    n_main = (n // _LANES) * _LANES

    if n_main == 0:
        # Fewer than 128 elements: plain jnp is already bandwidth-optimal.
        return (flat * jax.nn.sigmoid(flat)).reshape(orig_shape)

    # Pallas on the largest 128-aligned prefix (for aligned sizes this is the
    # whole array and the slice is a no-op); <128-element tail in plain jnp.
    main = flat[:n_main].reshape(n_main // _LANES, _LANES)
    out_flat = _swish_2d(main, target_block_bytes).reshape(-1)

    if n_main != n:
        tail = flat[n_main:]
        out_flat = jnp.concatenate([out_flat, tail * jax.nn.sigmoid(tail)])

    return out_flat.reshape(orig_shape)


if __name__ == "__main__":
    swish = jax.jit(swish_pallas)

    # NCHW conv-net activation: batch=2, C=4, 16x16 -> 2048 elems, pad-free
    # (16,128) view; splits into two (8,128) blocks when 2 TCs are detected.
    x = jax.random.normal(jax.random.PRNGKey(0), (2, 4, 16, 16), dtype=jnp.float32)
    y = swish(x)
    jax.block_until_ready(y)
    y_ref = x * jax.nn.sigmoid(x)
    assert y.shape == x.shape and y.dtype == x.dtype
    assert jnp.allclose(y, y_ref, atol=1e-5, rtol=1e-5)

    # Ragged size (385 elems) -> aligned-prefix Pallas + jnp tail, no pad/slice.
    x_ragged = jax.random.normal(jax.random.PRNGKey(1), (5, 7, 11), dtype=jnp.float32)
    y_ragged = swish(x_ragged)
    jax.block_until_ready(y_ragged)
    assert jnp.allclose(y_ragged, x_ragged * jax.nn.sigmoid(x_ragged),
                        atol=1e-5, rtol=1e-5)

    # Sub-128-element input -> pure-jnp fallback path.
    x_tiny = jax.random.normal(jax.random.PRNGKey(3), (3, 5, 7), dtype=jnp.float32)
    y_tiny = swish(x_tiny)
    jax.block_until_ready(y_tiny)
    assert jnp.allclose(y_tiny, x_tiny * jax.nn.sigmoid(x_tiny), atol=1e-6, rtol=1e-6)

    # bf16 -> exercises the dtype-aware (16,128) sublane handling.
    x_bf16 = jax.random.normal(jax.random.PRNGKey(2), (2, 4, 16, 16),
                               dtype=jnp.bfloat16)
    y_bf16 = swish(x_bf16)
    jax.block_until_ready(y_bf16)
    assert y_bf16.dtype == jnp.bfloat16
    assert jnp.allclose(y_bf16.astype(jnp.float32),
                        (x_bf16 * jax.nn.sigmoid(x_bf16)).astype(jnp.float32),
                        atol=1e-2, rtol=1e-2)

    print("KERNEL_OK")
</pallas_src>

<mosaic_0001>
module attributes {stable_mosaic.version = 11 : i64} {
  func.func @_swish_kernel(%arg0: i32, %arg1: memref<16x128xf32, #tpu.memory_space<vmem>>, %arg2: memref<16x128xf32, #tpu.memory_space<vmem>>) attributes {dimension_semantics = [#tpu.dimension_semantics<parallel>], iteration_bounds = array<i64: 1>, scalar_prefetch = 0 : i64, scratch_operands = 0 : i64, tpu.core_type = #tpu.core_type<tc>, window_params = [{transform_indices = @transform_0, window_bounds = array<i64: 16, 128>}, {transform_indices = @transform_1, window_bounds = array<i64: 16, 128>}]} {
    %c0 = arith.constant 0 : index
    %c0_0 = arith.constant 0 : index
    %0 = vector.load %arg1[%c0, %c0_0] : memref<16x128xf32, #tpu.memory_space<vmem>>, vector<16x128xf32>
    %cst = arith.constant 5.000000e-01 : f32
    %1 = vector.broadcast %cst : f32 to vector<16x128xf32>
    %2 = arith.mulf %0, %1 : vector<16x128xf32>
    %3 = math.tanh %2 : vector<16x128xf32>
    %cst_1 = arith.constant 5.000000e-01 : f32
    %4 = vector.broadcast %cst_1 : f32 to vector<16x128xf32>
    %5 = arith.mulf %3, %4 : vector<16x128xf32>
    %cst_2 = arith.constant 5.000000e-01 : f32
    %6 = vector.broadcast %cst_2 : f32 to vector<16x128xf32>
    %7 = arith.addf %5, %6 : vector<16x128xf32>
    %8 = arith.mulf %0, %7 : vector<16x128xf32>
    %c0_3 = arith.constant 0 : index
    %c0_4 = arith.constant 0 : index
    %9 = vector.load %arg2[%c0_3, %c0_4] : memref<16x128xf32, #tpu.memory_space<vmem>>, vector<16x128xf32>
    tpu.vector_store %arg2[%c0_3, %c0_4], %8 {strides = array<i32>} : memref<16x128xf32, #tpu.memory_space<vmem>>, vector<16x128xf32>,
    return
  }
  func.func @transform_0(%arg0: i32) -> (i32, i32) {
    %c0_i32 = arith.constant 0 : i32
    %c0_i32_0 = arith.constant 0 : i32
    return %arg0, %c0_i32 : i32, i32
  }
  func.func @transform_1(%arg0: i32) -> (i32, i32) {
    %c0_i32 = arith.constant 0 : i32
    %c0_i32_0 = arith.constant 0 : i32
    return %arg0, %c0_i32 : i32, i32
  }
}

</mosaic_0001>

<llo_original>
// kernel: swish_pallas.1
$region0: #{swish_pallas.1}
  #allocation0 [shape = 'u32[]', space=smem, size = 0x4, offset = 0x4, fixed_abs, tag = 'smem constant byte address 0x4 - core index']
  #allocation1 [shape = 'u32[144,128]{1,0:T(1,128)}', space=vmem, size = 0x12000, scoped, tag = 'internal scratch']
  %s0 = inlined_call_operand.vmem [shape: f32[16,128], index: 0, kind: input, shape index: {}]
  %s1 = inlined_call_operand.vmem [shape: f32[16,128], index: 1, kind: output, shape index: {}]
  %s2 = sld [smem:[#allocation0]]
  $region14: #{swish_pallas.1} parent=0
    _
  %s4 = ssub.s32 1, %s2
  %s5 = scalar_select 0, %s4, %s2
  // Predicated region
  $region2: #{swish_pallas.1} parent=0 // pred_check
    _
  $region3: #{swish_pallas.1} parent=0 // pred_check_branch
    %7 = sbr.rel (0) target = $region5
  $region4: #{swish_pallas.1} parent=0 // pred_region
    _
  $region5: #{swish_pallas.1} parent=0 // pred_fallthru
    _
  %v8 = vld [vmem:[%s0] sm:$0xff]
  %v9 = vld [vmem:[%s0 + $0x8] sm:$0xff]
  %v10 = vmul.f32 %v8, 0.5
  %v11 = vmul.f32 %v9, 0.5
  %v12 = vtanh.pop %v10
  %v13 = vtanh.pop %v11
  %v14 = vmul.f32 %v12, 0.5
  %v15 = vmul.f32 %v13, 0.5
  %v16 = vadd.f32 %v14, 0.5
  %v17 = vadd.f32 %v15, 0.5
  %v18 = vmul.f32 %v8, %v16
  %v19 = vmul.f32 %v9, %v17
  %20 = vst [vmem:[%s1] sm:$0xff] %v18
  %21 = vst [vmem:[%s1 + $0x8] sm:$0xff] %v19
  // Predicated region
  $region6: #{swish_pallas.1} parent=0 // pred_check
    _
  $region7: #{swish_pallas.1} parent=0 // pred_check_branch
    %23 = sbr.rel (0) target = $region9
  $region8: #{swish_pallas.1} parent=0 // pred_region
    _
  $region9: #{swish_pallas.1} parent=0 // pred_fallthru
    _
  // Predicated region
  $region10: #{swish_pallas.1} parent=0 // pred_check
    _
  $region11: #{swish_pallas.1} parent=0 // pred_check_branch
    %25 = sbr.rel (0) target = $region13
  $region12: #{swish_pallas.1} parent=0 // pred_region
    _
  $region13: #{swish_pallas.1} parent=0 // pred_fallthru
    _

</llo_original>
